<compile_context>
chip_gen: v7x
topology: tpu7x:2x2x1
jax: 0.10.0
libtpu: 0.0.40
codegen_flags: <defaults>
</compile_context>

<pallas_src>
import functools

import jax
import jax.numpy as jnp
from jax.experimental import pallas as pl
from jax.experimental.pallas import tpu as pltpu

LANE = 128


def _round_up(v, m):
    return ((v + m - 1) // m) * m


def _pad_to(a, shape):
    pads = [(0, t - s) for s, t in zip(a.shape, shape)]
    return jnp.pad(a, pads)


def _mlp_kernel(x_ref,
                w1_ref, w2_ref, w3_ref, w4_ref,
                b_ref,
                o_ref,
                *, x_in, h_pad, out_pad, vpu_layer1):
    x = x_ref[...]                      # (tile, x_in) f32
    b = b_ref[...]                      # (4, b_pad)   f32

    if vpu_layer1:
        # K = x_in is tiny: do layer 1 as a VPU outer product so we don't burn
        # an MXU pass whose contraction dim is padded up to 128/256.
        h = x[:, 0:1] * w1_ref[0:1, :]
        for k in range(1, x_in):
            h = h + x[:, k:k + 1] * w1_ref[k:k + 1, :]
    else:
        h = jnp.dot(x, w1_ref[...], preferred_element_type=jnp.float32)
    h = jnp.maximum(h + b[0:1, :h_pad], 0.0)

    h = jnp.dot(h, w2_ref[...], preferred_element_type=jnp.float32)
    h = jnp.maximum(h + b[1:2, :h_pad], 0.0)

    h = jnp.dot(h, w3_ref[...], preferred_element_type=jnp.float32)
    h = jnp.maximum(h + b[2:3, :h_pad], 0.0)

    h = jnp.dot(h, w4_ref[...], preferred_element_type=jnp.float32)
    o_ref[...] = (h + b[3:4, :out_pad]).astype(o_ref.dtype)


def model_latent_f(x, params, *, batch_tile=1024):
    """Forward pass of ModelLatentF.

    x: (N, x_in) float32, any N (batch is padded internally).
    params: dict with w1..w4 stored as (in_features, out_features) and
            b1..b4 as (1, out_features).
    """
    n, x_in = x.shape
    h_dim = params["w1"].shape[1]
    x_out = params["w4"].shape[1]

    h_pad = _round_up(h_dim, LANE)
    out_pad = _round_up(x_out, LANE)
    b_pad = max(h_pad, out_pad)

    # Lane-dense, zero-padded weights (zero pad columns/rows -> identical math).
    w1 = _pad_to(params["w1"].astype(jnp.float32), (x_in, h_pad))
    w2 = _pad_to(params["w2"].astype(jnp.float32), (h_pad, h_pad))
    w3 = _pad_to(params["w3"].astype(jnp.float32), (h_pad, h_pad))
    w4 = _pad_to(params["w4"].astype(jnp.float32), (h_pad, out_pad))

    # All four biases in one (4, b_pad) block: one DMA instead of four.
    b_all = jnp.zeros((4, b_pad), jnp.float32)
    b_all = b_all.at[0, :h_dim].set(params["b1"].reshape(-1))
    b_all = b_all.at[1, :h_dim].set(params["b2"].reshape(-1))
    b_all = b_all.at[2, :h_dim].set(params["b3"].reshape(-1))
    b_all = b_all.at[3, :x_out].set(params["b4"].reshape(-1))

    # Big tiles amortize the ~0.35us/grid-step overhead, but keep >= 2 steps
    # when possible so v7x's two TensorCores both get work. Per-row VMEM cost
    # is ~0.6 KB (x + padded output, double-buffered), so even 1024-row tiles
    # stay far below the scoped-VMEM limit on every generation.
    tile = max(8, min(_round_up(batch_tile, 8), _round_up((n + 1) // 2, 8)))
    n_pad = _round_up(n, tile)
    if n_pad != n:
        x = jnp.pad(x, ((0, n_pad - n), (0, 0)))

    grid = (n_pad // tile,)

    def batch_map(i):
        return (i, 0)

    def whole_map(i):
        return (0, 0)

    kernel = functools.partial(
        _mlp_kernel,
        x_in=x_in, h_pad=h_pad, out_pad=out_pad,
        vpu_layer1=(x_in <= 8))

    in_specs = [
        pl.BlockSpec((tile, x_in), batch_map),     # x tile
        pl.BlockSpec((x_in, h_pad), whole_map),    # w1
        pl.BlockSpec((h_pad, h_pad), whole_map),   # w2
        pl.BlockSpec((h_pad, h_pad), whole_map),   # w3
        pl.BlockSpec((h_pad, out_pad), whole_map), # w4
        pl.BlockSpec((4, b_pad), whole_map),       # biases (stacked)
    ]
    out_spec = pl.BlockSpec((tile, out_pad), batch_map)

    out_full = pl.pallas_call(
        kernel,
        out_shape=jax.ShapeDtypeStruct((n_pad, out_pad), jnp.float32),
        grid_spec=pltpu.PrefetchScalarGridSpec(
            num_scalar_prefetch=0,
            grid=grid,
            in_specs=in_specs,
            out_specs=out_spec,
        ),
        compiler_params=pltpu.CompilerParams(
            dimension_semantics=("parallel",)),
    )(x, w1, w2, w3, w4, b_all)

    # Strip batch padding and lane padding outside the kernel (cheap XLA slice).
    return out_full[:n, :x_out]


def init_params(key, x_in, h_dim, x_out):
    """Deterministic init mimicking PyTorch Linear default (uniform +-1/sqrt(fan_in)).

    Weights stored as (in_features, out_features), i.e. transposed relative to
    PyTorch's (out, in) layout.
    """
    keys = jax.random.split(key, 8)

    def linear(kw, kb, fan_in, fan_out):
        bound = 1.0 / jnp.sqrt(jnp.float32(fan_in))
        w = jax.random.uniform(kw, (fan_in, fan_out), jnp.float32, -bound, bound)
        b = jax.random.uniform(kb, (1, fan_out), jnp.float32, -bound, bound)
        return w, b

    w1, b1 = linear(keys[0], keys[1], x_in, h_dim)
    w2, b2 = linear(keys[2], keys[3], h_dim, h_dim)
    w3, b3 = linear(keys[4], keys[5], h_dim, h_dim)
    w4, b4 = linear(keys[6], keys[7], h_dim, x_out)
    return dict(w1=w1, b1=b1, w2=w2, b2=b2, w3=w3, b3=b3, w4=w4, b4=b4)


def reference_forward(x, p):
    hp = jax.lax.Precision.HIGHEST
    h = jnp.maximum(jnp.dot(x, p["w1"], precision=hp) + p["b1"], 0.0)
    h = jnp.maximum(jnp.dot(h, p["w2"], precision=hp) + p["b2"], 0.0)
    h = jnp.maximum(jnp.dot(h, p["w3"], precision=hp) + p["b3"], 0.0)
    return jnp.dot(h, p["w4"], precision=hp) + p["b4"]


if __name__ == "__main__":
    # ModelLatentF(x_in=2, H=50, x_out=50) — "Dense Net with w=50, d=4, in=2, out=50"
    X_IN, H, X_OUT = 2, 50, 50
    N = 300  # deliberately ragged to exercise batch padding

    key = jax.random.PRNGKey(0)
    k_params, k_x = jax.random.split(key)
    params = init_params(k_params, X_IN, H, X_OUT)
    x = jax.random.normal(k_x, (N, X_IN), jnp.float32)

    out = model_latent_f(x, params, batch_tile=256)
    out = jax.block_until_ready(out)

    ref = reference_forward(x, params)
    assert out.shape == (N, X_OUT)
    assert jnp.allclose(out, ref, atol=1e-4, rtol=1e-4), "mismatch vs reference"

    print("KERNEL_OK")
</pallas_src>

<mosaic_0001>
module attributes {stable_mosaic.version = 11 : i64} {
  func.func @_mlp_kernel(%arg0: i32, %arg1: memref<152x2xf32, #tpu.memory_space<vmem>>, %arg2: memref<2x128xf32, #tpu.memory_space<vmem>>, %arg3: memref<128x128xf32, #tpu.memory_space<vmem>>, %arg4: memref<128x128xf32, #tpu.memory_space<vmem>>, %arg5: memref<128x128xf32, #tpu.memory_space<vmem>>, %arg6: memref<4x128xf32, #tpu.memory_space<vmem>>, %arg7: memref<152x128xf32, #tpu.memory_space<vmem>>) attributes {dimension_semantics = [#tpu.dimension_semantics<parallel>], iteration_bounds = array<i64: 2>, scalar_prefetch = 0 : i64, scratch_operands = 0 : i64, tpu.core_type = #tpu.core_type<tc>, window_params = [{transform_indices = @transform_0, window_bounds = array<i64: 152, 2>}, {pipeline_mode = #tpu.pipeline_mode<synchronous>, transform_indices = @transform_1, window_bounds = array<i64: 2, 128>}, {pipeline_mode = #tpu.pipeline_mode<synchronous>, transform_indices = @transform_2, window_bounds = array<i64: 128, 128>}, {pipeline_mode = #tpu.pipeline_mode<synchronous>, transform_indices = @transform_3, window_bounds = array<i64: 128, 128>}, {pipeline_mode = #tpu.pipeline_mode<synchronous>, transform_indices = @transform_4, window_bounds = array<i64: 128, 128>}, {pipeline_mode = #tpu.pipeline_mode<synchronous>, transform_indices = @transform_5, window_bounds = array<i64: 4, 128>}, {transform_indices = @transform_6, window_bounds = array<i64: 152, 128>}]} {
    %c0 = arith.constant 0 : index
    %c0_0 = arith.constant 0 : index
    %0 = vector.load %arg1[%c0, %c0_0] : memref<152x2xf32, #tpu.memory_space<vmem>>, vector<152x2xf32>
    %c0_1 = arith.constant 0 : index
    %c0_2 = arith.constant 0 : index
    %1 = vector.load %arg6[%c0_1, %c0_2] : memref<4x128xf32, #tpu.memory_space<vmem>>, vector<4x128xf32>
    %2 = vector.extract_strided_slice %0 {offsets = [0, 0], sizes = [152, 1], strides = [1, 1]} : vector<152x2xf32> to vector<152x1xf32>
    %c0_3 = arith.constant 0 : index
    %c0_4 = arith.constant 0 : index
    %3 = vector.load %arg2[%c0_3, %c0_4] : memref<2x128xf32, #tpu.memory_space<vmem>>, vector<1x128xf32>
    %4 = vector.broadcast %2 : vector<152x1xf32> to vector<152x128xf32>
    %5 = vector.broadcast %3 : vector<1x128xf32> to vector<152x128xf32>
    %6 = arith.mulf %4, %5 : vector<152x128xf32>
    %7 = vector.extract_strided_slice %0 {offsets = [0, 1], sizes = [152, 1], strides = [1, 1]} : vector<152x2xf32> to vector<152x1xf32>
    %c1 = arith.constant 1 : index
    %c0_5 = arith.constant 0 : index
    %8 = vector.load %arg2[%c1, %c0_5] : memref<2x128xf32, #tpu.memory_space<vmem>>, vector<1x128xf32>
    %9 = vector.broadcast %7 : vector<152x1xf32> to vector<152x128xf32>
    %10 = vector.broadcast %8 : vector<1x128xf32> to vector<152x128xf32>
    %11 = arith.mulf %9, %10 : vector<152x128xf32>
    %12 = arith.addf %6, %11 : vector<152x128xf32>
    %13 = vector.extract_strided_slice %1 {offsets = [0, 0], sizes = [1, 128], strides = [1, 1]} : vector<4x128xf32> to vector<1x128xf32>
    %14 = vector.broadcast %13 : vector<1x128xf32> to vector<152x128xf32>
    %15 = arith.addf %12, %14 : vector<152x128xf32>
    %cst = arith.constant 0.000000e+00 : f32
    %16 = vector.broadcast %cst : f32 to vector<152x128xf32>
    %17 = arith.maximumf %15, %16 : vector<152x128xf32>
    %c0_6 = arith.constant 0 : index
    %c0_7 = arith.constant 0 : index
    %18 = vector.load %arg3[%c0_6, %c0_7] : memref<128x128xf32, #tpu.memory_space<vmem>>, vector<128x128xf32>
    %cst_8 = arith.constant dense<0.000000e+00> : vector<152x128xf32>
    %19 = tpu.matmul %17, %18, %cst_8 {dimension_numbers = #tpu.dot_dimension_numbers<[1], [0], [0], [1], [0, 0, 1, 1], [], []>} : vector<152x128xf32>, vector<128x128xf32>, vector<152x128xf32> -> vector<152x128xf32>
    %20 = vector.extract_strided_slice %1 {offsets = [1, 0], sizes = [1, 128], strides = [1, 1]} : vector<4x128xf32> to vector<1x128xf32>
    %21 = vector.broadcast %20 : vector<1x128xf32> to vector<152x128xf32>
    %22 = arith.addf %19, %21 : vector<152x128xf32>
    %cst_9 = arith.constant 0.000000e+00 : f32
    %23 = vector.broadcast %cst_9 : f32 to vector<152x128xf32>
    %24 = arith.maximumf %22, %23 : vector<152x128xf32>
    %c0_10 = arith.constant 0 : index
    %c0_11 = arith.constant 0 : index
    %25 = vector.load %arg4[%c0_10, %c0_11] : memref<128x128xf32, #tpu.memory_space<vmem>>, vector<128x128xf32>
    %cst_12 = arith.constant dense<0.000000e+00> : vector<152x128xf32>
    %26 = tpu.matmul %24, %25, %cst_12 {dimension_numbers = #tpu.dot_dimension_numbers<[1], [0], [0], [1], [0, 0, 1, 1], [], []>} : vector<152x128xf32>, vector<128x128xf32>, vector<152x128xf32> -> vector<152x128xf32>
    %27 = vector.extract_strided_slice %1 {offsets = [2, 0], sizes = [1, 128], strides = [1, 1]} : vector<4x128xf32> to vector<1x128xf32>
    %28 = vector.broadcast %27 : vector<1x128xf32> to vector<152x128xf32>
    %29 = arith.addf %26, %28 : vector<152x128xf32>
    %cst_13 = arith.constant 0.000000e+00 : f32
    %30 = vector.broadcast %cst_13 : f32 to vector<152x128xf32>
    %31 = arith.maximumf %29, %30 : vector<152x128xf32>
    %c0_14 = arith.constant 0 : index
    %c0_15 = arith.constant 0 : index
    %32 = vector.load %arg5[%c0_14, %c0_15] : memref<128x128xf32, #tpu.memory_space<vmem>>, vector<128x128xf32>
    %cst_16 = arith.constant dense<0.000000e+00> : vector<152x128xf32>
    %33 = tpu.matmul %31, %32, %cst_16 {dimension_numbers = #tpu.dot_dimension_numbers<[1], [0], [0], [1], [0, 0, 1, 1], [], []>} : vector<152x128xf32>, vector<128x128xf32>, vector<152x128xf32> -> vector<152x128xf32>
    %34 = vector.extract_strided_slice %1 {offsets = [3, 0], sizes = [1, 128], strides = [1, 1]} : vector<4x128xf32> to vector<1x128xf32>
    %35 = vector.broadcast %34 : vector<1x128xf32> to vector<152x128xf32>
    %36 = arith.addf %33, %35 : vector<152x128xf32>
    %c0_17 = arith.constant 0 : index
    %c0_18 = arith.constant 0 : index
    %37 = vector.load %arg7[%c0_17, %c0_18] : memref<152x128xf32, #tpu.memory_space<vmem>>, vector<152x128xf32>
    tpu.vector_store %arg7[%c0_17, %c0_18], %36 {strides = array<i32>} : memref<152x128xf32, #tpu.memory_space<vmem>>, vector<152x128xf32>,
    return
  }
  func.func @transform_0(%arg0: i32) -> (i32, i32) {
    %c0_i32 = arith.constant 0 : i32
    %c0_i32_0 = arith.constant 0 : i32
    return %arg0, %c0_i32 : i32, i32
  }
  func.func @transform_1(%arg0: i32) -> (i32, i32) {
    %c0_i32 = arith.constant 0 : i32
    %c0_i32_0 = arith.constant 0 : i32
    %c0_i32_1 = arith.constant 0 : i32
    return %c0_i32, %c0_i32_0 : i32, i32
  }
  func.func @transform_2(%arg0: i32) -> (i32, i32) {
    %c0_i32 = arith.constant 0 : i32
    %c0_i32_0 = arith.constant 0 : i32
    %c0_i32_1 = arith.constant 0 : i32
    return %c0_i32, %c0_i32_0 : i32, i32
  }
  func.func @transform_3(%arg0: i32) -> (i32, i32) {
    %c0_i32 = arith.constant 0 : i32
    %c0_i32_0 = arith.constant 0 : i32
    %c0_i32_1 = arith.constant 0 : i32
    return %c0_i32, %c0_i32_0 : i32, i32
  }
  func.func @transform_4(%arg0: i32) -> (i32, i32) {
    %c0_i32 = arith.constant 0 : i32
    %c0_i32_0 = arith.constant 0 : i32
    %c0_i32_1 = arith.constant 0 : i32
    return %c0_i32, %c0_i32_0 : i32, i32
  }
  func.func @transform_5(%arg0: i32) -> (i32, i32) {
    %c0_i32 = arith.constant 0 : i32
    %c0_i32_0 = arith.constant 0 : i32
    %c0_i32_1 = arith.constant 0 : i32
    return %c0_i32, %c0_i32_0 : i32, i32
  }
  func.func @transform_6(%arg0: i32) -> (i32, i32) {
    %c0_i32 = arith.constant 0 : i32
    %c0_i32_0 = arith.constant 0 : i32
    return %arg0, %c0_i32 : i32, i32
  }
}

</mosaic_0001>

<llo_original>
// kernel: tpu_custom_call.1
$region0: #{tpu_custom_call.1}
  #allocation0 [shape = 'u32[]', space=smem, size = 0x4, offset = 0x4, fixed_abs, tag = 'smem constant byte address 0x4 - core index']
  #allocation1 [shape = 'u32[144,128]{1,0:T(1,128)}', space=vmem, size = 0x12000, scoped, tag = 'internal scratch']
  %s0 = inlined_call_operand.vmem [shape: f32[304,2], index: 0, kind: input, shape index: {}]
  %s1 = inlined_call_operand.vmem [shape: f32[2,128], index: 1, kind: input, shape index: {}]
  %s2 = inlined_call_operand.vmem [shape: f32[128,128], index: 2, kind: input, shape index: {}]
  %s3 = inlined_call_operand.vmem [shape: f32[128,128], index: 3, kind: input, shape index: {}]
  %s4 = inlined_call_operand.hbm [shape: f32[128,128], index: 4, kind: input, shape index: {}]
  %s5 = inlined_call_operand.vmem [shape: f32[4,128], index: 5, kind: input, shape index: {}]
  %s6 = inlined_call_operand.hbm [shape: f32[304,128], index: 6, kind: output, shape index: {}]
  %s7 = sld [smem:[#allocation0]]
  $region61: #{tpu_custom_call.1} parent=0
    _
  %s9 = ssub.s32 1, %s7
  %s10 = scalar_select 0, %s9, %s7
  $region1: #{tpu_custom_call.1} parent=0
    #allocation2 [shape = 'u8[65536]{0}', space=vmem, size = 0x10000, scoped, tag = 'input window, operand 4, single buffered']
    #allocation3 [shape = 's32[2]{0}', space=sflag, size = 0x8, scoped, tag = 'scoped memory for tpu_custom_call.1']
    #allocation4 [shape = 's32[2]{0}', space=sflag, size = 0x8, scoped, tag = 'scoped memory for tpu_custom_call.1']
    #allocation5 [shape = 'u8[155648]{0}', space=vmem, size = 0x26000, scoped, tag = 'output window, operand 0']
    %11 = vsyncpa [#allocation3], 0
    %12 = vsyncpa [#allocation4], 0
    %s13 = scalar_lea.sflag [#allocation4], 1
    %14 = vsyncpa %s13, 0
    loop: start=0, step=1, limit=4
    $region2: #{tpu_custom_call.1} parent=1 // loop_pre_header
      _
    $region3: #{tpu_custom_call.1} parent=1 // loop_header
      %s16 = sphi 0, %s20
      %p17 = scmp.ge.s32.totalorder %s16, 4
      %s26 = sphi 0, %s28
      %s29 = sphi 0, %s26
      %s30 = sphi 0, %s29
      %s46 = sphi 0, %s30
      %s50 = sphi 0, %s50
      %s52 = sphi 0, %s50
      %s53 = sphi 0, %s52
      %s67 = sphi 0, %s53
      %s71 = sphi 0, %s71
      %s73 = sphi 0, %s71
      %s74 = sphi 0, %s73
      %s88 = sphi 0, %s74
      %s92 = sphi 0, %s92
      %s94 = sphi 0, %s92
      %s95 = sphi 0, %s94
      %s109 = sphi 0, %s95
      %s113 = sphi 0, %s113
      %s115 = sphi 0, %s113
      %s116 = sphi 0, %s115
      %s130 = sphi 0, %s116
      %s134 = sphi 0, %s134
      %s136 = sphi 0, %s134
      %s137 = sphi 0, %s136
      %s151 = sphi 0, %s137
      %s157 = sphi 0, %s159
      %s160 = sphi 0, %s157
      %s161 = sphi 0, %s160
      %s177 = sphi 0, %s161
    $region4: #{tpu_custom_call.1} parent=1 // loop_header_branch
      %19 = sbr.rel (%p17) target = $region8
    $region5: #{tpu_custom_call.1} parent=1 // loop_body
      %s21 = ssub.s32 %s16, 1
      %s22 = ssub.s32 %s16, 2
      %s23 = sadd.s32 %s16, 1
      %s24 = ssub.s32 %s16, %s23
      %p25 = scmp.eq.s32.totalorder %s24, 0
      %s27 = sadd.s32 %s26, 1
      %s28 = scalar_select %p25, %s26, %s27
      %p31 = pneg %p25
      %p32 = scmp.eq.s32.totalorder %s16, 1
      %p33 = por %p31, %p32
      %p34 = scmp.ne.s32.totalorder %s26, %s29
      %p35 = scmp.eq.s32.totalorder %s16, 0
      %p36 = por %p34, %p35
      %p37 = scmp.ne.s32.totalorder %s26, %s29
      %p38 = scmp.eq.s32.totalorder %s21, 1
      %p39 = por %p37, %p38
      %p40 = scmp.ne.s32.totalorder %s29, %s30
      %p41 = scmp.eq.s32.totalorder %s21, 0
      %p42 = por %p40, %p41
      %p43 = scmp.ne.s32.totalorder %s29, %s30
      %p44 = scmp.eq.s32.totalorder %s22, 1
      %p45 = por %p43, %p44
      %p47 = scmp.ne.s32.totalorder %s30, %s46
      %p48 = scmp.eq.s32.totalorder %s22, 0
      %p49 = por %p47, %p48
      %s51 = sadd.s32 %s50, 1
      %p54 = scmp.eq.s32.totalorder %s16, 1
      %p55 = scmp.ne.s32.totalorder %s50, %s52
      %p56 = scmp.eq.s32.totalorder %s16, 0
      %p57 = por %p55, %p56
      %p58 = scmp.ne.s32.totalorder %s50, %s52
      %p59 = scmp.eq.s32.totalorder %s21, 1
      %p60 = por %p58, %p59
      %p61 = scmp.ne.s32.totalorder %s52, %s53
      %p62 = scmp.eq.s32.totalorder %s21, 0
      %p63 = por %p61, %p62
      %p64 = scmp.ne.s32.totalorder %s52, %s53
      %p65 = scmp.eq.s32.totalorder %s22, 1
      %p66 = por %p64, %p65
      %p68 = scmp.ne.s32.totalorder %s53, %s67
      %p69 = scmp.eq.s32.totalorder %s22, 0
      %p70 = por %p68, %p69
      %s72 = sadd.s32 %s71, 1
      %p75 = scmp.eq.s32.totalorder %s16, 1
      %p76 = scmp.ne.s32.totalorder %s71, %s73
      %p77 = scmp.eq.s32.totalorder %s16, 0
      %p78 = por %p76, %p77
      %p79 = scmp.ne.s32.totalorder %s71, %s73
      %p80 = scmp.eq.s32.totalorder %s21, 1
      %p81 = por %p79, %p80
      %p82 = scmp.ne.s32.totalorder %s73, %s74
      %p83 = scmp.eq.s32.totalorder %s21, 0
      %p84 = por %p82, %p83
      %p85 = scmp.ne.s32.totalorder %s73, %s74
      %p86 = scmp.eq.s32.totalorder %s22, 1
      %p87 = por %p85, %p86
      %p89 = scmp.ne.s32.totalorder %s74, %s88
      %p90 = scmp.eq.s32.totalorder %s22, 0
      %p91 = por %p89, %p90
      %s93 = sadd.s32 %s92, 1
      %p96 = scmp.eq.s32.totalorder %s16, 1
      %p97 = scmp.ne.s32.totalorder %s92, %s94
      %p98 = scmp.eq.s32.totalorder %s16, 0
      %p99 = por %p97, %p98
      %p100 = scmp.ne.s32.totalorder %s92, %s94
      %p101 = scmp.eq.s32.totalorder %s21, 1
      %p102 = por %p100, %p101
      %p103 = scmp.ne.s32.totalorder %s94, %s95
      %p104 = scmp.eq.s32.totalorder %s21, 0
      %p105 = por %p103, %p104
      %p106 = scmp.ne.s32.totalorder %s94, %s95
      %p107 = scmp.eq.s32.totalorder %s22, 1
      %p108 = por %p106, %p107
      %p110 = scmp.ne.s32.totalorder %s95, %s109
      %p111 = scmp.eq.s32.totalorder %s22, 0
      %p112 = por %p110, %p111
      %s114 = sadd.s32 %s113, 1
      %p117 = scmp.eq.s32.totalorder %s16, 1
      %p118 = scmp.ne.s32.totalorder %s113, %s115
      %p119 = scmp.eq.s32.totalorder %s16, 0
      %p120 = por %p118, %p119
      %p121 = scmp.ne.s32.totalorder %s113, %s115
      %p122 = scmp.eq.s32.totalorder %s21, 1
      %p123 = por %p121, %p122
      %p124 = scmp.ne.s32.totalorder %s115, %s116
      %p125 = scmp.eq.s32.totalorder %s21, 0
      %p126 = por %p124, %p125
      %p127 = scmp.ne.s32.totalorder %s115, %s116
      %p128 = scmp.eq.s32.totalorder %s22, 1
      %p129 = por %p127, %p128
      %p131 = scmp.ne.s32.totalorder %s116, %s130
      %p132 = scmp.eq.s32.totalorder %s22, 0
      %p133 = por %p131, %p132
      %s135 = sadd.s32 %s134, 1
      %p138 = scmp.eq.s32.totalorder %s16, 1
      %p139 = scmp.ne.s32.totalorder %s134, %s136
      %p140 = scmp.eq.s32.totalorder %s16, 0
      %p141 = por %p139, %p140
      %p142 = scmp.ne.s32.totalorder %s134, %s136
      %p143 = scmp.eq.s32.totalorder %s21, 1
      %p144 = por %p142, %p143
      %p145 = scmp.ne.s32.totalorder %s136, %s137
      %p146 = scmp.eq.s32.totalorder %s21, 0
      %p147 = por %p145, %p146
      %p148 = scmp.ne.s32.totalorder %s136, %s137
      %p149 = scmp.eq.s32.totalorder %s22, 1
      %p150 = por %p148, %p149
      %p152 = scmp.ne.s32.totalorder %s137, %s151
      %p153 = scmp.eq.s32.totalorder %s22, 0
      %p154 = por %p152, %p153
      %s155 = ssub.s32 %s16, %s23
      %p156 = scmp.eq.s32.totalorder %s155, 0
      %s158 = sadd.s32 %s157, 1
      %s159 = scalar_select %p156, %s157, %s158
      %p162 = pneg %p156
      %p163 = scmp.eq.s32.totalorder %s16, 1
      %p164 = por %p162, %p163
      %p165 = scmp.ne.s32.totalorder %s157, %s160
      %p166 = scmp.eq.s32.totalorder %s16, 0
      %p167 = por %p165, %p166
      %p168 = scmp.ne.s32.totalorder %s157, %s160
      %p169 = scmp.eq.s32.totalorder %s21, 1
      %p170 = por %p168, %p169
      %p171 = scmp.ne.s32.totalorder %s160, %s161
      %p172 = scmp.eq.s32.totalorder %s21, 0
      %p173 = por %p171, %p172
      %p174 = scmp.ne.s32.totalorder %s160, %s161
      %p175 = scmp.eq.s32.totalorder %s22, 1
      %p176 = por %p174, %p175
      %p178 = scmp.ne.s32.totalorder %s161, %s177
      %p179 = scmp.eq.s32.totalorder %s22, 0
      %p180 = por %p178, %p179
      %p181 = scmp.le.s32.totalorder 1, %s16
      %p182 = scmp.lt.s32.totalorder %s16, 3
      %p183 = pnand %p181, %p182
      %p184 = pneg %p183
      // Predicated region
      $region9: #{tpu_custom_call.1} parent=5 // pred_check
        _
      $region10: #{tpu_custom_call.1} parent=5 // pred_check_branch
        %186 = sbr.rel (%p183) target = $region12
      $region11: #{tpu_custom_call.1} parent=5 // pred_region
        %s187 = ssub.s32 %s16, 1
        // Predicated region
        $region13: #{tpu_custom_call.1} parent=11 // pred_check
          %p188 = pneg %p63
        $region14: #{tpu_custom_call.1} parent=11 // pred_check_branch
          %190 = sbr.rel (%p188) target = $region16
        $region15: #{tpu_custom_call.1} parent=11 // pred_region
          _
        $region16: #{tpu_custom_call.1} parent=11 // pred_fallthru
          _
        // Predicated region
        $region17: #{tpu_custom_call.1} parent=11 // pred_check
          %p191 = pneg %p84
        $region18: #{tpu_custom_call.1} parent=11 // pred_check_branch
          %193 = sbr.rel (%p191) target = $region20
        $region19: #{tpu_custom_call.1} parent=11 // pred_region
          _
        $region20: #{tpu_custom_call.1} parent=11 // pred_fallthru
          _
        // Predicated region
        $region21: #{tpu_custom_call.1} parent=11 // pred_check
          %p194 = pneg %p105
        $region22: #{tpu_custom_call.1} parent=11 // pred_check_branch
          %196 = sbr.rel (%p194) target = $region24
        $region23: #{tpu_custom_call.1} parent=11 // pred_region
          _
        $region24: #{tpu_custom_call.1} parent=11 // pred_fallthru
          _
        // Predicated region
        $region25: #{tpu_custom_call.1} parent=11 // pred_check
          %p197 = pneg %p126
        $region26: #{tpu_custom_call.1} parent=11 // pred_check_branch
          %199 = sbr.rel (%p197) target = $region28
        $region27: #{tpu_custom_call.1} parent=11 // pred_region
          %s201 = ssub.s32 2048, 2048
          %202 = vsyncadd [#allocation3], %s201
          %s203 = sshll.u32 [#allocation2], 4
          %s204 = int_to_ptr.vmem [resolvable:$true] %s203
          %209 = dma.hbm_to_vmem [thread:$0]  %s4, 2048, %s204, [#allocation3], 128, 128, 8
        $region28: #{tpu_custom_call.1} parent=11 // pred_fallthru
          _
        // Predicated region
        $region29: #{tpu_custom_call.1} parent=11 // pred_check
          %p210 = pneg %p147
        $region30: #{tpu_custom_call.1} parent=11 // pred_check_branch
          %212 = sbr.rel (%p210) target = $region32
        $region31: #{tpu_custom_call.1} parent=11 // pred_region
          _
        $region32: #{tpu_custom_call.1} parent=11 // pred_fallthru
          _
      $region12: #{tpu_custom_call.1} parent=5 // pred_fallthru
        _
      %p213 = scmp.lt.s32.totalorder %s16, 2
      // Predicated region
      $region33: #{tpu_custom_call.1} parent=5 // pred_check
        %p214 = pneg %p213
      $region34: #{tpu_custom_call.1} parent=5 // pred_check_branch
        %216 = sbr.rel (%p214) target = $region36
      $region35: #{tpu_custom_call.1} parent=5 // pred_region
        // Predicated region
        $region37: #{tpu_custom_call.1} parent=35 // pred_check
          %p217 = pneg %p36
        $region38: #{tpu_custom_call.1} parent=35 // pred_check_branch
          %219 = sbr.rel (%p217) target = $region40
        $region39: #{tpu_custom_call.1} parent=35 // pred_region
          %s220 = smul.u32 19, %s16
          %p221 = scmp.lt.s32.totalorder %s220, 37
          %s222 = scalar_select %p221, %s220, 37
          %s223 = smul.addr %s222, 8
          %s224 = scalar_lea.vmem %s0, %s223
          %s225 = smul.u32 19, %s16
        $region40: #{tpu_custom_call.1} parent=35 // pred_fallthru
          _
      $region36: #{tpu_custom_call.1} parent=5 // pred_fallthru
        _
      %p226 = scmp.le.s32.totalorder 1, %s16
      %p227 = scmp.lt.s32.totalorder %s16, 3
      %p228 = pnand %p226, %p227
      %p229 = pneg %p228
      // Predicated region
      $region41: #{tpu_custom_call.1} parent=5 // pred_check
        _
      $region42: #{tpu_custom_call.1} parent=5 // pred_check_branch
        %231 = sbr.rel (%p228) target = $region44
      $region43: #{tpu_custom_call.1} parent=5 // pred_region
        %s232 = ssub.s32 %s16, 1
        // Predicated region
        $region45: #{tpu_custom_call.1} parent=43 // pred_check
          %p233 = pneg %p126
        $region46: #{tpu_custom_call.1} parent=43 // pred_check_branch
          %235 = sbr.rel (%p233) target = $region48
        $region47: #{tpu_custom_call.1} parent=43 // pred_region
          %236 = dma.done [#allocation3], 2048
        $region48: #{tpu_custom_call.1} parent=43 // pred_fallthru
          _
        %s237 = smul.u32 19, %s21
        %p238 = scmp.lt.s32.totalorder %s237, 37
        %s239 = scalar_select %p238, %s237, 37
        %s240 = smul.addr %s239, 8
        %s241 = scalar_lea.vmem %s0, %s240
        %p242 = pneg %p42
        %p243 = pneg %p39
        %p244 = pneg %p63
        %p245 = pneg %p60
        %p246 = pneg %p84
        %p247 = pneg %p81
        %p248 = pneg %p105
        %p249 = pneg %p102
        %p250 = pneg %p126
        %p251 = pneg %p123
        %p252 = pneg %p147
        %p253 = pneg %p144
        %p254 = pneg %p173
        %p255 = pneg %p170
        %s256 = sand.u32 %s160, 1
        %s257 = scalar_lea.sflag [#allocation4], %s256
        %s258 = sand.u32 %s160, 1
        %s259 = smul.addr %s258, 152
        %s260 = scalar_lea.vmem [#allocation5], %s259
        %s261 = smul.u32 19, %s21
        %p262 = scmp.lt.s32.totalorder %s261, 37
        %s263 = scalar_select %p262, %s261, 37
        %s264 = smul.addr %s263, 8
        %s265 = scalar_lea.vmem %s0, %s264
        %s266 = smul.u32 19, %s21
        %s267 = smul.u32 19, %s21
        %v268 = vld [vmem:[%s265] sm:$0xff]
        %v269 = vld [vmem:[%s265 + $0x8] sm:$0xff]
        %v270 = vld [vmem:[%s265 + $0x10] sm:$0xff]
        %v271 = vld [vmem:[%s265 + $0x18] sm:$0xff]
        %v272 = vld [vmem:[%s265 + $0x20] sm:$0xff]
        %v273 = vld [vmem:[%s265 + $0x28] sm:$0xff]
        %v274 = vld [vmem:[%s265 + $0x30] sm:$0xff]
        %v275 = vld [vmem:[%s265 + $0x38] sm:$0xff]
        %v276 = vld [vmem:[%s265 + $0x40] sm:$0xff]
        %v277 = vld [vmem:[%s265 + $0x48] sm:$0xff]
        %v278 = vld [vmem:[%s265 + $0x50] sm:$0xff]
        %v279 = vld [vmem:[%s265 + $0x58] sm:$0xff]
        %v280 = vld [vmem:[%s265 + $0x60] sm:$0xff]
        %v281 = vld [vmem:[%s265 + $0x68] sm:$0xff]
        %v282 = vld [vmem:[%s265 + $0x70] sm:$0xff]
        %v283 = vld [vmem:[%s265 + $0x78] sm:$0xff]
        %v284 = vld [vmem:[%s265 + $0x80] sm:$0xff]
        %v285 = vld [vmem:[%s265 + $0x88] sm:$0xff]
        %v286 = vld [vmem:[%s265 + $0x90] sm:$0xff]
        %v287 = vld [vmem:[%s5] sm:$0xf]
        %v288 = vld [vmem:[%s1] sm:$0x1]
        %290 = vset.pattern.permute.xlu0 0
        %291 = vperm.xlu0 %290, %v268
        %v292 = vpop.permute.xlu0 %291
        %295 = vset.pattern.permute.xlu0 0
        %296 = vperm.xlu0 %295, %v269
        %v297 = vpop.permute.xlu0 %296
        %300 = vset.pattern.permute.xlu0 0
        %301 = vperm.xlu0 %300, %v270
        %v302 = vpop.permute.xlu0 %301
        %305 = vset.pattern.permute.xlu0 0
        %306 = vperm.xlu0 %305, %v271
        %v307 = vpop.permute.xlu0 %306
        %310 = vset.pattern.permute.xlu0 0
        %311 = vperm.xlu0 %310, %v272
        %v312 = vpop.permute.xlu0 %311
        %315 = vset.pattern.permute.xlu0 0
        %316 = vperm.xlu0 %315, %v273
        %v317 = vpop.permute.xlu0 %316
        %320 = vset.pattern.permute.xlu0 0
        %321 = vperm.xlu0 %320, %v274
        %v322 = vpop.permute.xlu0 %321
        %325 = vset.pattern.permute.xlu0 0
        %326 = vperm.xlu0 %325, %v275
        %v327 = vpop.permute.xlu0 %326
        %330 = vset.pattern.permute.xlu0 0
        %331 = vperm.xlu0 %330, %v276
        %v332 = vpop.permute.xlu0 %331
        %335 = vset.pattern.permute.xlu0 0
        %336 = vperm.xlu0 %335, %v277
        %v337 = vpop.permute.xlu0 %336
        %340 = vset.pattern.permute.xlu0 0
        %341 = vperm.xlu0 %340, %v278
        %v342 = vpop.permute.xlu0 %341
        %345 = vset.pattern.permute.xlu0 0
        %346 = vperm.xlu0 %345, %v279
        %v347 = vpop.permute.xlu0 %346
        %350 = vset.pattern.permute.xlu0 0
        %351 = vperm.xlu0 %350, %v280
        %v352 = vpop.permute.xlu0 %351
        %355 = vset.pattern.permute.xlu0 0
        %356 = vperm.xlu0 %355, %v281
        %v357 = vpop.permute.xlu0 %356
        %360 = vset.pattern.permute.xlu0 0
        %361 = vperm.xlu0 %360, %v282
        %v362 = vpop.permute.xlu0 %361
        %365 = vset.pattern.permute.xlu0 0
        %366 = vperm.xlu0 %365, %v283
        %v367 = vpop.permute.xlu0 %366
        %370 = vset.pattern.permute.xlu0 0
        %371 = vperm.xlu0 %370, %v284
        %v372 = vpop.permute.xlu0 %371
        %375 = vset.pattern.permute.xlu0 0
        %376 = vperm.xlu0 %375, %v285
        %v377 = vpop.permute.xlu0 %376
        %380 = vset.pattern.permute.xlu0 0
        %381 = vperm.xlu0 %380, %v286
        %v382 = vpop.permute.xlu0 %381
        %v384 = vlaneseq
        %v385 = vshrl.u32 %v384, 7
        %v386 = vsub.s32 0, %v385
        %v387 = vrot.slane %v288, %v386
        %v388 = vmul.f32 %v292, %v387
        %v389 = vmul.f32 %v297, %v387
        %v390 = vmul.f32 %v302, %v387
        %v391 = vmul.f32 %v307, %v387
        %v392 = vmul.f32 %v312, %v387
        %v393 = vmul.f32 %v317, %v387
        %v394 = vmul.f32 %v322, %v387
        %v395 = vmul.f32 %v327, %v387
        %v396 = vmul.f32 %v332, %v387
        %v397 = vmul.f32 %v337, %v387
        %v398 = vmul.f32 %v342, %v387
        %v399 = vmul.f32 %v347, %v387
        %v400 = vmul.f32 %v352, %v387
        %v401 = vmul.f32 %v357, %v387
        %v402 = vmul.f32 %v362, %v387
        %v403 = vmul.f32 %v367, %v387
        %v404 = vmul.f32 %v372, %v387
        %v405 = vmul.f32 %v377, %v387
        %v406 = vmul.f32 %v382, %v387
        %v407 = vld [vmem:[%s1 + $0x1] sm:$0x1]
        %408 = vset.pattern.permute.xlu0 1
        %409 = vperm.xlu0 %408, %v268
        %v410 = vpop.permute.xlu0 %409
        %412 = vset.pattern.permute.xlu0 1
        %413 = vperm.xlu0 %412, %v269
        %v414 = vpop.permute.xlu0 %413
        %416 = vset.pattern.permute.xlu0 1
        %417 = vperm.xlu0 %416, %v270
        %v418 = vpop.permute.xlu0 %417
        %420 = vset.pattern.permute.xlu0 1
        %421 = vperm.xlu0 %420, %v271
        %v422 = vpop.permute.xlu0 %421
        %424 = vset.pattern.permute.xlu0 1
        %425 = vperm.xlu0 %424, %v272
        %v426 = vpop.permute.xlu0 %425
        %428 = vset.pattern.permute.xlu0 1
        %429 = vperm.xlu0 %428, %v273
        %v430 = vpop.permute.xlu0 %429
        %432 = vset.pattern.permute.xlu0 1
        %433 = vperm.xlu0 %432, %v274
        %v434 = vpop.permute.xlu0 %433
        %436 = vset.pattern.permute.xlu0 1
        %437 = vperm.xlu0 %436, %v275
        %v438 = vpop.permute.xlu0 %437
        %440 = vset.pattern.permute.xlu0 1
        %441 = vperm.xlu0 %440, %v276
        %v442 = vpop.permute.xlu0 %441
        %444 = vset.pattern.permute.xlu0 1
        %445 = vperm.xlu0 %444, %v277
        %v446 = vpop.permute.xlu0 %445
        %448 = vset.pattern.permute.xlu0 1
        %449 = vperm.xlu0 %448, %v278
        %v450 = vpop.permute.xlu0 %449
        %452 = vset.pattern.permute.xlu0 1
        %453 = vperm.xlu0 %452, %v279
        %v454 = vpop.permute.xlu0 %453
        %456 = vset.pattern.permute.xlu0 1
        %457 = vperm.xlu0 %456, %v280
        %v458 = vpop.permute.xlu0 %457
        %460 = vset.pattern.permute.xlu0 1
        %461 = vperm.xlu0 %460, %v281
        %v462 = vpop.permute.xlu0 %461
        %464 = vset.pattern.permute.xlu0 1
        %465 = vperm.xlu0 %464, %v282
        %v466 = vpop.permute.xlu0 %465
        %468 = vset.pattern.permute.xlu0 1
        %469 = vperm.xlu0 %468, %v283
        %v470 = vpop.permute.xlu0 %469
        %472 = vset.pattern.permute.xlu0 1
        %473 = vperm.xlu0 %472, %v284
        %v474 = vpop.permute.xlu0 %473
        %476 = vset.pattern.permute.xlu0 1
        %477 = vperm.xlu0 %476, %v285
        %v478 = vpop.permute.xlu0 %477
        %480 = vset.pattern.permute.xlu0 1
        %481 = vperm.xlu0 %480, %v286
        %v482 = vpop.permute.xlu0 %481
        %v484 = vlaneseq
        %v485 = vshrl.u32 %v484, 7
        %v486 = vsub.s32 0, %v485
        %v487 = vrot.slane %v407, %v486
        %v488 = vmul.f32 %v410, %v487
        %v489 = vmul.f32 %v414, %v487
        %v490 = vmul.f32 %v418, %v487
        %v491 = vmul.f32 %v422, %v487
        %v492 = vmul.f32 %v426, %v487
        %v493 = vmul.f32 %v430, %v487
        %v494 = vmul.f32 %v434, %v487
        %v495 = vmul.f32 %v438, %v487
        %v496 = vmul.f32 %v442, %v487
        %v497 = vmul.f32 %v446, %v487
        %v498 = vmul.f32 %v450, %v487
        %v499 = vmul.f32 %v454, %v487
        %v500 = vmul.f32 %v458, %v487
        %v501 = vmul.f32 %v462, %v487
        %v502 = vmul.f32 %v466, %v487
        %v503 = vmul.f32 %v470, %v487
        %v504 = vmul.f32 %v474, %v487
        %v505 = vmul.f32 %v478, %v487
        %v506 = vmul.f32 %v482, %v487
        %v507 = vadd.f32 %v388, %v488
        %v508 = vadd.f32 %v389, %v489
        %v509 = vadd.f32 %v390, %v490
        %v510 = vadd.f32 %v391, %v491
        %v511 = vadd.f32 %v392, %v492
        %v512 = vadd.f32 %v393, %v493
        %v513 = vadd.f32 %v394, %v494
        %v514 = vadd.f32 %v395, %v495
        %v515 = vadd.f32 %v396, %v496
        %v516 = vadd.f32 %v397, %v497
        %v517 = vadd.f32 %v398, %v498
        %v518 = vadd.f32 %v399, %v499
        %v519 = vadd.f32 %v400, %v500
        %v520 = vadd.f32 %v401, %v501
        %v521 = vadd.f32 %v402, %v502
        %v522 = vadd.f32 %v403, %v503
        %v523 = vadd.f32 %v404, %v504
        %v524 = vadd.f32 %v405, %v505
        %v525 = vadd.f32 %v406, %v506
        %v526 = vlaneseq
        %v527 = vshrl.u32 %v526, 7
        %v528 = vsub.s32 0, %v527
        %v529 = vrot.slane %v287, %v528
        %v530 = vadd.f32 %v507, %v529
        %v531 = vadd.f32 %v508, %v529
        %v532 = vadd.f32 %v509, %v529
        %v533 = vadd.f32 %v510, %v529
        %v534 = vadd.f32 %v511, %v529
        %v535 = vadd.f32 %v512, %v529
        %v536 = vadd.f32 %v513, %v529
        %v537 = vadd.f32 %v514, %v529
        %v538 = vadd.f32 %v515, %v529
        %v539 = vadd.f32 %v516, %v529
        %v540 = vadd.f32 %v517, %v529
        %v541 = vadd.f32 %v518, %v529
        %v542 = vadd.f32 %v519, %v529
        %v543 = vadd.f32 %v520, %v529
        %v544 = vadd.f32 %v521, %v529
        %v545 = vadd.f32 %v522, %v529
        %v546 = vadd.f32 %v523, %v529
        %v547 = vadd.f32 %v524, %v529
        %v548 = vadd.f32 %v525, %v529
        %v549 = vmax.f32 %v530, 0.0
        %v550 = vmax.f32 %v531, 0.0
        %v551 = vmax.f32 %v532, 0.0
        %v552 = vmax.f32 %v533, 0.0
        %v553 = vmax.f32 %v534, 0.0
        %v554 = vmax.f32 %v535, 0.0
        %v555 = vmax.f32 %v536, 0.0
        %v556 = vmax.f32 %v537, 0.0
        %v557 = vmax.f32 %v538, 0.0
        %v558 = vmax.f32 %v539, 0.0
        %v559 = vmax.f32 %v540, 0.0
        %v560 = vmax.f32 %v541, 0.0
        %v561 = vmax.f32 %v542, 0.0
        %v562 = vmax.f32 %v543, 0.0
        %v563 = vmax.f32 %v544, 0.0
        %v564 = vmax.f32 %v545, 0.0
        %v565 = vmax.f32 %v546, 0.0
        %v566 = vmax.f32 %v547, 0.0
        %v567 = vmax.f32 %v548, 0.0
        %v568 = vld [vmem:[%s2] sm:$0xff]
        %v569 = vld [vmem:[%s2 + $0x8] sm:$0xff]
        %v570 = vld [vmem:[%s2 + $0x10] sm:$0xff]
        %v571 = vld [vmem:[%s2 + $0x18] sm:$0xff]
        %v572 = vld [vmem:[%s2 + $0x20] sm:$0xff]
        %v573 = vld [vmem:[%s2 + $0x28] sm:$0xff]
        %v574 = vld [vmem:[%s2 + $0x30] sm:$0xff]
        %v575 = vld [vmem:[%s2 + $0x38] sm:$0xff]
        %v576 = vld [vmem:[%s2 + $0x40] sm:$0xff]
        %v577 = vld [vmem:[%s2 + $0x48] sm:$0xff]
        %v578 = vld [vmem:[%s2 + $0x50] sm:$0xff]
        %v579 = vld [vmem:[%s2 + $0x58] sm:$0xff]
        %v580 = vld [vmem:[%s2 + $0x60] sm:$0xff]
        %v581 = vld [vmem:[%s2 + $0x68] sm:$0xff]
        %v582 = vld [vmem:[%s2 + $0x70] sm:$0xff]
        %v583 = vld [vmem:[%s2 + $0x78] sm:$0xff]
        %v584 = vlaneseq
        %v585 = vshrl.u32 %v584, 7
        %v586 = vsub.s32 1, %v585
        %v587 = vrot.slane %v287, %v586
        %588 = vmatprep.subr.mxu0 0.0
        %589 = vmatpush1.msra.mxu0 %v568
        %590 = vmatprep.subr.mxu0 0.0
        %591 = vmatpush1.msra.mxu0 %v569
        %592 = vmatprep.subr.mxu0 0.0
        %593 = vmatpush1.msra.mxu0 %v570
        %594 = vmatprep.subr.mxu0 0.0
        %595 = vmatpush1.msra.mxu0 %v571
        %596 = vmatprep.subr.mxu0 0.0
        %597 = vmatpush1.msra.mxu0 %v572
        %598 = vmatprep.subr.mxu0 0.0
        %599 = vmatpush1.msra.mxu0 %v573
        %600 = vmatprep.subr.mxu0 0.0
        %601 = vmatpush1.msra.mxu0 %v574
        %602 = vmatprep.subr.mxu0 0.0
        %603 = vmatpush1.msra.mxu0 %v575
        %604 = vmatprep.subr.mxu0 0.0
        %605 = vmatpush1.msra.mxu0 %v576
        %606 = vmatprep.subr.mxu0 0.0
        %607 = vmatpush1.msra.mxu0 %v577
        %608 = vmatprep.subr.mxu0 0.0
        %609 = vmatpush1.msra.mxu0 %v578
        %610 = vmatprep.subr.mxu0 0.0
        %611 = vmatpush1.msra.mxu0 %v579
        %612 = vmatprep.subr.mxu0 0.0
        %613 = vmatpush1.msra.mxu0 %v580
        %614 = vmatprep.subr.mxu0 0.0
        %615 = vmatpush1.msra.mxu0 %v581
        %616 = vmatprep.subr.mxu0 0.0
        %617 = vmatpush1.msra.mxu0 %v582
        %618 = vmatprep.subr.mxu0 0.0
        %619 = vmatpush1.msra.mxu0 %v583
        %620 = vmatprep.subr.mxu0 0.0
        %621 = vmatpush1.msra.mxu0 0.0
        %622 = vmatprep.subr.mxu0 0.0
        %623 = vmatpush1.msra.mxu0 0.0
        %624 = vmatprep.subr.mxu0 0.0
        %625 = vmatpush1.msra.mxu0 0.0
        %626 = vmatprep.subr.mxu0 0.0
        %627 = vmatpush1.msra.mxu0 0.0
        %628 = vmatprep.subr.mxu0 0.0
        %629 = vmatpush1.msra.mxu0 0.0
        %630 = vmatprep.subr.mxu0 0.0
        %631 = vmatpush1.msra.mxu0 0.0
        %632 = vmatprep.subr.mxu0 0.0
        %633 = vmatpush1.msra.mxu0 0.0
        %634 = vmatprep.subr.mxu0 0.0
        %635 = vmatpush1.msra.mxu0 0.0
        %636 = vmatprep.subr.mxu0 0.0
        %637 = vmatpush1.msra.mxu0 0.0
        %638 = vmatprep.subr.mxu0 0.0
        %639 = vmatpush1.msra.mxu0 0.0
        %640 = vmatprep.subr.mxu0 0.0
        %641 = vmatpush1.msra.mxu0 0.0
        %642 = vmatprep.subr.mxu0 0.0
        %643 = vmatpush1.msra.mxu0 0.0
        %644 = vmatprep.subr.mxu0 0.0
        %645 = vmatpush1.msra.mxu0 0.0
        %646 = vmatprep.subr.mxu0 0.0
        %647 = vmatpush1.msra.mxu0 0.0
        %648 = vmatprep.subr.mxu0 0.0
        %649 = vmatpush1.msra.mxu0 0.0
        %650 = vmatprep.subr.mxu0 0.0
        %651 = vmatpush1.msra.mxu0 0.0
        %652 = vmatprep.mubr.f32.mxu0 0.0
        %653 = vmatmul.mubr.f32.gmra.mrb[0].mxu0 %v549
        %v654 = vpop.f32.mrb[0].mxu0
        %v655 = vadd.f32 %v587, %v654
        %v656 = vpop.f32.mrb[0].mxu0
        %657 = vmatprep.mubr.f32.mxu0 0.0
        %658 = vmatmul.mubr.f32.gmra.mrb[0].mxu0 %v550
        %v659 = vpop.f32.mrb[0].mxu0
        %v660 = vadd.f32 %v587, %v659
        %v661 = vpop.f32.mrb[0].mxu0
        %662 = vmatprep.mubr.f32.mxu0 0.0
        %663 = vmatmul.mubr.f32.gmra.mrb[0].mxu0 %v551
        %v664 = vpop.f32.mrb[0].mxu0
        %v665 = vadd.f32 %v587, %v664
        %v666 = vpop.f32.mrb[0].mxu0
        %667 = vmatprep.mubr.f32.mxu0 0.0
        %668 = vmatmul.mubr.f32.gmra.mrb[0].mxu0 %v552
        %v669 = vpop.f32.mrb[0].mxu0
        %v670 = vadd.f32 %v587, %v669
        %v671 = vpop.f32.mrb[0].mxu0
        %672 = vmatprep.mubr.f32.mxu0 0.0
        %673 = vmatmul.mubr.f32.gmra.mrb[0].mxu0 %v553
        %v674 = vpop.f32.mrb[0].mxu0
        %v675 = vadd.f32 %v587, %v674
        %v676 = vpop.f32.mrb[0].mxu0
        %677 = vmatprep.mubr.f32.mxu0 0.0
        %678 = vmatmul.mubr.f32.gmra.mrb[0].mxu0 %v554
        %v679 = vpop.f32.mrb[0].mxu0
        %v680 = vadd.f32 %v587, %v679
        %v681 = vpop.f32.mrb[0].mxu0
        %682 = vmatprep.mubr.f32.mxu0 0.0
        %683 = vmatmul.mubr.f32.gmra.mrb[0].mxu0 %v555
        %v684 = vpop.f32.mrb[0].mxu0
        %v685 = vadd.f32 %v587, %v684
        %v686 = vpop.f32.mrb[0].mxu0
        %687 = vmatprep.mubr.f32.mxu0 0.0
        %688 = vmatmul.mubr.f32.gmra.mrb[0].mxu0 %v556
        %v689 = vpop.f32.mrb[0].mxu0
        %v690 = vadd.f32 %v587, %v689
        %v691 = vpop.f32.mrb[0].mxu0
        %692 = vmatprep.mubr.f32.mxu0 0.0
        %693 = vmatmul.mubr.f32.gmra.mrb[0].mxu0 %v557
        %v694 = vpop.f32.mrb[0].mxu0
        %v695 = vadd.f32 %v587, %v694
        %v696 = vpop.f32.mrb[0].mxu0
        %697 = vmatprep.mubr.f32.mxu0 0.0
        %698 = vmatmul.mubr.f32.gmra.mrb[0].mxu0 %v558
        %v699 = vpop.f32.mrb[0].mxu0
        %v700 = vadd.f32 %v587, %v699
        %v701 = vpop.f32.mrb[0].mxu0
        %702 = vmatprep.mubr.f32.mxu0 0.0
        %703 = vmatmul.mubr.f32.gmra.mrb[0].mxu0 %v559
        %v704 = vpop.f32.mrb[0].mxu0
        %v705 = vadd.f32 %v587, %v704
        %v706 = vpop.f32.mrb[0].mxu0
        %707 = vmatprep.mubr.f32.mxu0 0.0
        %708 = vmatmul.mubr.f32.gmra.mrb[0].mxu0 %v560
        %v709 = vpop.f32.mrb[0].mxu0
        %v710 = vadd.f32 %v587, %v709
        %v711 = vpop.f32.mrb[0].mxu0
        %712 = vmatprep.mubr.f32.mxu0 0.0
        %713 = vmatmul.mubr.f32.gmra.mrb[0].mxu0 %v561
        %v714 = vpop.f32.mrb[0].mxu0
        %v715 = vadd.f32 %v587, %v714
        %v716 = vpop.f32.mrb[0].mxu0
        %717 = vmatprep.mubr.f32.mxu0 0.0
        %718 = vmatmul.mubr.f32.gmra.mrb[0].mxu0 %v562
        %v719 = vpop.f32.mrb[0].mxu0
        %v720 = vadd.f32 %v587, %v719
        %v721 = vpop.f32.mrb[0].mxu0
        %722 = vmatprep.mubr.f32.mxu0 0.0
        %723 = vmatmul.mubr.f32.gmra.mrb[0].mxu0 %v563
        %v724 = vpop.f32.mrb[0].mxu0
        %v725 = vadd.f32 %v587, %v724
        %v726 = vpop.f32.mrb[0].mxu0
        %727 = vmatprep.mubr.f32.mxu0 0.0
        %728 = vmatmul.mubr.f32.gmra.mrb[0].mxu0 %v564
        %v729 = vpop.f32.mrb[0].mxu0
        %v730 = vadd.f32 %v587, %v729
        %v731 = vpop.f32.mrb[0].mxu0
        %732 = vmatprep.mubr.f32.mxu0 0.0
        %733 = vmatmul.mubr.f32.gmra.mrb[0].mxu0 %v565
        %v734 = vpop.f32.mrb[0].mxu0
        %v735 = vadd.f32 %v587, %v734
        %v736 = vpop.f32.mrb[0].mxu0
        %737 = vmatprep.mubr.f32.mxu0 0.0
        %738 = vmatmul.mubr.f32.gmra.mrb[0].mxu0 %v566
        %v739 = vpop.f32.mrb[0].mxu0
        %v740 = vadd.f32 %v587, %v739
        %v741 = vpop.f32.mrb[0].mxu0
        %742 = vmatprep.mubr.f32.mxu0 0.0
        %743 = vmatmul.mubr.f32.gmra.mrb[0].mxu0 %v567
        %v744 = vpop.f32.mrb[0].mxu0
        %v745 = vadd.f32 %v587, %v744
        %v746 = vpop.f32.mrb[0].mxu0
        %747 = vdwg.mxu0
        %v748 = vmax.f32 %v655, 0.0
        %v749 = vmax.f32 %v660, 0.0
        %v750 = vmax.f32 %v665, 0.0
        %v751 = vmax.f32 %v670, 0.0
        %v752 = vmax.f32 %v675, 0.0
        %v753 = vmax.f32 %v680, 0.0
        %v754 = vmax.f32 %v685, 0.0
        %v755 = vmax.f32 %v690, 0.0
        %v756 = vmax.f32 %v695, 0.0
        %v757 = vmax.f32 %v700, 0.0
        %v758 = vmax.f32 %v705, 0.0
        %v759 = vmax.f32 %v710, 0.0
        %v760 = vmax.f32 %v715, 0.0
        %v761 = vmax.f32 %v720, 0.0
        %v762 = vmax.f32 %v725, 0.0
        %v763 = vmax.f32 %v730, 0.0
        %v764 = vmax.f32 %v735, 0.0
        %v765 = vmax.f32 %v740, 0.0
        %v766 = vmax.f32 %v745, 0.0
        %v767 = vld [vmem:[%s3] sm:$0xff]
        %v768 = vld [vmem:[%s3 + $0x8] sm:$0xff]
        %v769 = vld [vmem:[%s3 + $0x10] sm:$0xff]
        %v770 = vld [vmem:[%s3 + $0x18] sm:$0xff]
        %v771 = vld [vmem:[%s3 + $0x20] sm:$0xff]
        %v772 = vld [vmem:[%s3 + $0x28] sm:$0xff]
        %v773 = vld [vmem:[%s3 + $0x30] sm:$0xff]
        %v774 = vld [vmem:[%s3 + $0x38] sm:$0xff]
        %v775 = vld [vmem:[%s3 + $0x40] sm:$0xff]
        %v776 = vld [vmem:[%s3 + $0x48] sm:$0xff]
        %v777 = vld [vmem:[%s3 + $0x50] sm:$0xff]
        %v778 = vld [vmem:[%s3 + $0x58] sm:$0xff]
        %v779 = vld [vmem:[%s3 + $0x60] sm:$0xff]
        %v780 = vld [vmem:[%s3 + $0x68] sm:$0xff]
        %v781 = vld [vmem:[%s3 + $0x70] sm:$0xff]
        %v782 = vld [vmem:[%s3 + $0x78] sm:$0xff]
        %v783 = vlaneseq
        %v784 = vshrl.u32 %v783, 7
        %v785 = vsub.s32 2, %v784
        %v786 = vrot.slane %v287, %v785
        %787 = vmatprep.subr.mxu0 0.0
        %788 = vmatpush1.msra.mxu0 %v767
        %789 = vmatprep.subr.mxu0 0.0
        %790 = vmatpush1.msra.mxu0 %v768
        %791 = vmatprep.subr.mxu0 0.0
        %792 = vmatpush1.msra.mxu0 %v769
        %793 = vmatprep.subr.mxu0 0.0
        %794 = vmatpush1.msra.mxu0 %v770
        %795 = vmatprep.subr.mxu0 0.0
        %796 = vmatpush1.msra.mxu0 %v771
        %797 = vmatprep.subr.mxu0 0.0
        %798 = vmatpush1.msra.mxu0 %v772
        %799 = vmatprep.subr.mxu0 0.0
        %800 = vmatpush1.msra.mxu0 %v773
        %801 = vmatprep.subr.mxu0 0.0
        %802 = vmatpush1.msra.mxu0 %v774
        %803 = vmatprep.subr.mxu0 0.0
        %804 = vmatpush1.msra.mxu0 %v775
        %805 = vmatprep.subr.mxu0 0.0
        %806 = vmatpush1.msra.mxu0 %v776
        %807 = vmatprep.subr.mxu0 0.0
        %808 = vmatpush1.msra.mxu0 %v777
        %809 = vmatprep.subr.mxu0 0.0
        %810 = vmatpush1.msra.mxu0 %v778
        %811 = vmatprep.subr.mxu0 0.0
        %812 = vmatpush1.msra.mxu0 %v779
        %813 = vmatprep.subr.mxu0 0.0
        %814 = vmatpush1.msra.mxu0 %v780
        %815 = vmatprep.subr.mxu0 0.0
        %816 = vmatpush1.msra.mxu0 %v781
        %817 = vmatprep.subr.mxu0 0.0
        %818 = vmatpush1.msra.mxu0 %v782
        %819 = vmatprep.subr.mxu0 0.0
        %820 = vmatpush1.msra.mxu0 0.0
        %821 = vmatprep.subr.mxu0 0.0
        %822 = vmatpush1.msra.mxu0 0.0
        %823 = vmatprep.subr.mxu0 0.0
        %824 = vmatpush1.msra.mxu0 0.0
        %825 = vmatprep.subr.mxu0 0.0
        %826 = vmatpush1.msra.mxu0 0.0
        %827 = vmatprep.subr.mxu0 0.0
        %828 = vmatpush1.msra.mxu0 0.0
        %829 = vmatprep.subr.mxu0 0.0
        %830 = vmatpush1.msra.mxu0 0.0
        %831 = vmatprep.subr.mxu0 0.0
        %832 = vmatpush1.msra.mxu0 0.0
        %833 = vmatprep.subr.mxu0 0.0
        %834 = vmatpush1.msra.mxu0 0.0
        %835 = vmatprep.subr.mxu0 0.0
        %836 = vmatpush1.msra.mxu0 0.0
        %837 = vmatprep.subr.mxu0 0.0
        %838 = vmatpush1.msra.mxu0 0.0
        %839 = vmatprep.subr.mxu0 0.0
        %840 = vmatpush1.msra.mxu0 0.0
        %841 = vmatprep.subr.mxu0 0.0
        %842 = vmatpush1.msra.mxu0 0.0
        %843 = vmatprep.subr.mxu0 0.0
        %844 = vmatpush1.msra.mxu0 0.0
        %845 = vmatprep.subr.mxu0 0.0
        %846 = vmatpush1.msra.mxu0 0.0
        %847 = vmatprep.subr.mxu0 0.0
        %848 = vmatpush1.msra.mxu0 0.0
        %849 = vmatprep.subr.mxu0 0.0
        %850 = vmatpush1.msra.mxu0 0.0
        %851 = vmatprep.mubr.f32.mxu0 0.0
        %852 = vmatmul.mubr.f32.gmra.mrb[0].mxu0 %v748
        %v853 = vpop.f32.mrb[0].mxu0
        %v854 = vadd.f32 %v786, %v853
        %v855 = vpop.f32.mrb[0].mxu0
        %856 = vmatprep.mubr.f32.mxu0 0.0
        %857 = vmatmul.mubr.f32.gmra.mrb[0].mxu0 %v749
        %v858 = vpop.f32.mrb[0].mxu0
        %v859 = vadd.f32 %v786, %v858
        %v860 = vpop.f32.mrb[0].mxu0
        %861 = vmatprep.mubr.f32.mxu0 0.0
        %862 = vmatmul.mubr.f32.gmra.mrb[0].mxu0 %v750
        %v863 = vpop.f32.mrb[0].mxu0
        %v864 = vadd.f32 %v786, %v863
        %v865 = vpop.f32.mrb[0].mxu0
        %866 = vmatprep.mubr.f32.mxu0 0.0
        %867 = vmatmul.mubr.f32.gmra.mrb[0].mxu0 %v751
        %v868 = vpop.f32.mrb[0].mxu0
        %v869 = vadd.f32 %v786, %v868
        %v870 = vpop.f32.mrb[0].mxu0
        %871 = vmatprep.mubr.f32.mxu0 0.0
        %872 = vmatmul.mubr.f32.gmra.mrb[0].mxu0 %v752
        %v873 = vpop.f32.mrb[0].mxu0
        %v874 = vadd.f32 %v786, %v873
        %v875 = vpop.f32.mrb[0].mxu0
        %876 = vmatprep.mubr.f32.mxu0 0.0
        %877 = vmatmul.mubr.f32.gmra.mrb[0].mxu0 %v753
        %v878 = vpop.f32.mrb[0].mxu0
        %v879 = vadd.f32 %v786, %v878
        %v880 = vpop.f32.mrb[0].mxu0
        %881 = vmatprep.mubr.f32.mxu0 0.0
        %882 = vmatmul.mubr.f32.gmra.mrb[0].mxu0 %v754
        %v883 = vpop.f32.mrb[0].mxu0
        %v884 = vadd.f32 %v786, %v883
        %v885 = vpop.f32.mrb[0].mxu0
        %886 = vmatprep.mubr.f32.mxu0 0.0
        %887 = vmatmul.mubr.f32.gmra.mrb[0].mxu0 %v755
        %v888 = vpop.f32.mrb[0].mxu0
        %v889 = vadd.f32 %v786, %v888
        %v890 = vpop.f32.mrb[0].mxu0
        %891 = vmatprep.mubr.f32.mxu0 0.0
        %892 = vmatmul.mubr.f32.gmra.mrb[0].mxu0 %v756
        %v893 = vpop.f32.mrb[0].mxu0
        %v894 = vadd.f32 %v786, %v893
        %v895 = vpop.f32.mrb[0].mxu0
        %896 = vmatprep.mubr.f32.mxu0 0.0
        %897 = vmatmul.mubr.f32.gmra.mrb[0].mxu0 %v757
        %v898 = vpop.f32.mrb[0].mxu0
        %v899 = vadd.f32 %v786, %v898
        %v900 = vpop.f32.mrb[0].mxu0
        %901 = vmatprep.mubr.f32.mxu0 0.0
        %902 = vmatmul.mubr.f32.gmra.mrb[0].mxu0 %v758
        %v903 = vpop.f32.mrb[0].mxu0
        %v904 = vadd.f32 %v786, %v903
        %v905 = vpop.f32.mrb[0].mxu0
        %906 = vmatprep.mubr.f32.mxu0 0.0
        %907 = vmatmul.mubr.f32.gmra.mrb[0].mxu0 %v759
        %v908 = vpop.f32.mrb[0].mxu0
        %v909 = vadd.f32 %v786, %v908
        %v910 = vpop.f32.mrb[0].mxu0
        %911 = vmatprep.mubr.f32.mxu0 0.0
        %912 = vmatmul.mubr.f32.gmra.mrb[0].mxu0 %v760
        %v913 = vpop.f32.mrb[0].mxu0
        %v914 = vadd.f32 %v786, %v913
        %v915 = vpop.f32.mrb[0].mxu0
        %916 = vmatprep.mubr.f32.mxu0 0.0
        %917 = vmatmul.mubr.f32.gmra.mrb[0].mxu0 %v761
        %v918 = vpop.f32.mrb[0].mxu0
        %v919 = vadd.f32 %v786, %v918
        %v920 = vpop.f32.mrb[0].mxu0
        %921 = vmatprep.mubr.f32.mxu0 0.0
        %922 = vmatmul.mubr.f32.gmra.mrb[0].mxu0 %v762
        %v923 = vpop.f32.mrb[0].mxu0
        %v924 = vadd.f32 %v786, %v923
        %v925 = vpop.f32.mrb[0].mxu0
        %926 = vmatprep.mubr.f32.mxu0 0.0
        %927 = vmatmul.mubr.f32.gmra.mrb[0].mxu0 %v763
        %v928 = vpop.f32.mrb[0].mxu0
        %v929 = vadd.f32 %v786, %v928
        %v930 = vpop.f32.mrb[0].mxu0
        %931 = vmatprep.mubr.f32.mxu0 0.0
        %932 = vmatmul.mubr.f32.gmra.mrb[0].mxu0 %v764
        %v933 = vpop.f32.mrb[0].mxu0
        %v934 = vadd.f32 %v786, %v933
        %v935 = vpop.f32.mrb[0].mxu0
        %936 = vmatprep.mubr.f32.mxu0 0.0
        %937 = vmatmul.mubr.f32.gmra.mrb[0].mxu0 %v765
        %v938 = vpop.f32.mrb[0].mxu0
        %v939 = vadd.f32 %v786, %v938
        %v940 = vpop.f32.mrb[0].mxu0
        %941 = vmatprep.mubr.f32.mxu0 0.0
        %942 = vmatmul.mubr.f32.gmra.mrb[0].mxu0 %v766
        %v943 = vpop.f32.mrb[0].mxu0
        %v944 = vadd.f32 %v786, %v943
        %v945 = vpop.f32.mrb[0].mxu0
        %946 = vdwg.mxu0
        %v947 = vmax.f32 %v854, 0.0
        %v948 = vmax.f32 %v859, 0.0
        %v949 = vmax.f32 %v864, 0.0
        %v950 = vmax.f32 %v869, 0.0
        %v951 = vmax.f32 %v874, 0.0
        %v952 = vmax.f32 %v879, 0.0
        %v953 = vmax.f32 %v884, 0.0
        %v954 = vmax.f32 %v889, 0.0
        %v955 = vmax.f32 %v894, 0.0
        %v956 = vmax.f32 %v899, 0.0
        %v957 = vmax.f32 %v904, 0.0
        %v958 = vmax.f32 %v909, 0.0
        %v959 = vmax.f32 %v914, 0.0
        %v960 = vmax.f32 %v919, 0.0
        %v961 = vmax.f32 %v924, 0.0
        %v962 = vmax.f32 %v929, 0.0
        %v963 = vmax.f32 %v934, 0.0
        %v964 = vmax.f32 %v939, 0.0
        %v965 = vmax.f32 %v944, 0.0
        %v966 = vld [vmem:[#allocation2] sm:$0xff]
        %v967 = vld [vmem:[#allocation2 + $0x8] sm:$0xff]
        %v968 = vld [vmem:[#allocation2 + $0x10] sm:$0xff]
        %v969 = vld [vmem:[#allocation2 + $0x18] sm:$0xff]
        %v970 = vld [vmem:[#allocation2 + $0x20] sm:$0xff]
        %v971 = vld [vmem:[#allocation2 + $0x28] sm:$0xff]
        %v972 = vld [vmem:[#allocation2 + $0x30] sm:$0xff]
        %v973 = vld [vmem:[#allocation2 + $0x38] sm:$0xff]
        %v974 = vld [vmem:[#allocation2 + $0x40] sm:$0xff]
        %v975 = vld [vmem:[#allocation2 + $0x48] sm:$0xff]
        %v976 = vld [vmem:[#allocation2 + $0x50] sm:$0xff]
        %v977 = vld [vmem:[#allocation2 + $0x58] sm:$0xff]
        %v978 = vld [vmem:[#allocation2 + $0x60] sm:$0xff]
        %v979 = vld [vmem:[#allocation2 + $0x68] sm:$0xff]
        %v980 = vld [vmem:[#allocation2 + $0x70] sm:$0xff]
        %v981 = vld [vmem:[#allocation2 + $0x78] sm:$0xff]
        %v982 = vlaneseq
        %v983 = vshrl.u32 %v982, 7
        %v984 = vsub.s32 3, %v983
        %v985 = vrot.slane %v287, %v984
        %986 = vmatprep.subr.mxu0 0.0
        %987 = vmatpush1.msra.mxu0 %v966
        %988 = vmatprep.subr.mxu0 0.0
        %989 = vmatpush1.msra.mxu0 %v967
        %990 = vmatprep.subr.mxu0 0.0
        %991 = vmatpush1.msra.mxu0 %v968
        %992 = vmatprep.subr.mxu0 0.0
        %993 = vmatpush1.msra.mxu0 %v969
        %994 = vmatprep.subr.mxu0 0.0
        %995 = vmatpush1.msra.mxu0 %v970
        %996 = vmatprep.subr.mxu0 0.0
        %997 = vmatpush1.msra.mxu0 %v971
        %998 = vmatprep.subr.mxu0 0.0
        %999 = vmatpush1.msra.mxu0 %v972
        %1000 = vmatprep.subr.mxu0 0.0
        %1001 = vmatpush1.msra.mxu0 %v973
        %1002 = vmatprep.subr.mxu0 0.0
        %1003 = vmatpush1.msra.mxu0 %v974
        %1004 = vmatprep.subr.mxu0 0.0
        %1005 = vmatpush1.msra.mxu0 %v975
        %1006 = vmatprep.subr.mxu0 0.0
        %1007 = vmatpush1.msra.mxu0 %v976
        %1008 = vmatprep.subr.mxu0 0.0
        %1009 = vmatpush1.msra.mxu0 %v977
        %1010 = vmatprep.subr.mxu0 0.0
        %1011 = vmatpush1.msra.mxu0 %v978
        %1012 = vmatprep.subr.mxu0 0.0
        %1013 = vmatpush1.msra.mxu0 %v979
        %1014 = vmatprep.subr.mxu0 0.0
        %1015 = vmatpush1.msra.mxu0 %v980
        %1016 = vmatprep.subr.mxu0 0.0
        %1017 = vmatpush1.msra.mxu0 %v981
        %1018 = vmatprep.subr.mxu0 0.0
        %1019 = vmatpush1.msra.mxu0 0.0
        %1020 = vmatprep.subr.mxu0 0.0
        %1021 = vmatpush1.msra.mxu0 0.0
        %1022 = vmatprep.subr.mxu0 0.0
        %1023 = vmatpush1.msra.mxu0 0.0
        %1024 = vmatprep.subr.mxu0 0.0
        %1025 = vmatpush1.msra.mxu0 0.0
        %1026 = vmatprep.subr.mxu0 0.0
        %1027 = vmatpush1.msra.mxu0 0.0
        %1028 = vmatprep.subr.mxu0 0.0
        %1029 = vmatpush1.msra.mxu0 0.0
        %1030 = vmatprep.subr.mxu0 0.0
        %1031 = vmatpush1.msra.mxu0 0.0
        %1032 = vmatprep.subr.mxu0 0.0
        %1033 = vmatpush1.msra.mxu0 0.0
        %1034 = vmatprep.subr.mxu0 0.0
        %1035 = vmatpush1.msra.mxu0 0.0
        %1036 = vmatprep.subr.mxu0 0.0
        %1037 = vmatpush1.msra.mxu0 0.0
        %1038 = vmatprep.subr.mxu0 0.0
        %1039 = vmatpush1.msra.mxu0 0.0
        %1040 = vmatprep.subr.mxu0 0.0
        %1041 = vmatpush1.msra.mxu0 0.0
        %1042 = vmatprep.subr.mxu0 0.0
        %1043 = vmatpush1.msra.mxu0 0.0
        %1044 = vmatprep.subr.mxu0 0.0
        %1045 = vmatpush1.msra.mxu0 0.0
        %1046 = vmatprep.subr.mxu0 0.0
        %1047 = vmatpush1.msra.mxu0 0.0
        %1048 = vmatprep.subr.mxu0 0.0
        %1049 = vmatpush1.msra.mxu0 0.0
        %1050 = vmatprep.mubr.f32.mxu0 0.0
        %1051 = vmatmul.mubr.f32.gmra.mrb[0].mxu0 %v947
        %v1052 = vpop.f32.mrb[0].mxu0
        %v1053 = vadd.f32 %v985, %v1052
        %v1054 = vpop.f32.mrb[0].mxu0
        %1055 = vmatprep.mubr.f32.mxu0 0.0
        %1056 = vmatmul.mubr.f32.gmra.mrb[0].mxu0 %v948
        %v1057 = vpop.f32.mrb[0].mxu0
        %v1058 = vadd.f32 %v985, %v1057
        %v1059 = vpop.f32.mrb[0].mxu0
        %1060 = vmatprep.mubr.f32.mxu0 0.0
        %1061 = vmatmul.mubr.f32.gmra.mrb[0].mxu0 %v949
        %v1062 = vpop.f32.mrb[0].mxu0
        %v1063 = vadd.f32 %v985, %v1062
        %v1064 = vpop.f32.mrb[0].mxu0
        %1065 = vmatprep.mubr.f32.mxu0 0.0
        %1066 = vmatmul.mubr.f32.gmra.mrb[0].mxu0 %v950
        %v1067 = vpop.f32.mrb[0].mxu0
        %v1068 = vadd.f32 %v985, %v1067
        %v1069 = vpop.f32.mrb[0].mxu0
        %1070 = vmatprep.mubr.f32.mxu0 0.0
        %1071 = vmatmul.mubr.f32.gmra.mrb[0].mxu0 %v951
        %v1072 = vpop.f32.mrb[0].mxu0
        %v1073 = vadd.f32 %v985, %v1072
        %v1074 = vpop.f32.mrb[0].mxu0
        %1075 = vmatprep.mubr.f32.mxu0 0.0
        %1076 = vmatmul.mubr.f32.gmra.mrb[0].mxu0 %v952
        %v1077 = vpop.f32.mrb[0].mxu0
        %v1078 = vadd.f32 %v985, %v1077
        %v1079 = vpop.f32.mrb[0].mxu0
        %1080 = vmatprep.mubr.f32.mxu0 0.0
        %1081 = vmatmul.mubr.f32.gmra.mrb[0].mxu0 %v953
        %v1082 = vpop.f32.mrb[0].mxu0
        %v1083 = vadd.f32 %v985, %v1082
        %v1084 = vpop.f32.mrb[0].mxu0
        %1085 = vmatprep.mubr.f32.mxu0 0.0
        %1086 = vmatmul.mubr.f32.gmra.mrb[0].mxu0 %v954
        %v1087 = vpop.f32.mrb[0].mxu0
        %v1088 = vadd.f32 %v985, %v1087
        %v1089 = vpop.f32.mrb[0].mxu0
        %1090 = vmatprep.mubr.f32.mxu0 0.0
        %1091 = vmatmul.mubr.f32.gmra.mrb[0].mxu0 %v955
        %v1092 = vpop.f32.mrb[0].mxu0
        %v1093 = vadd.f32 %v985, %v1092
        %v1094 = vpop.f32.mrb[0].mxu0
        %1095 = vmatprep.mubr.f32.mxu0 0.0
        %1096 = vmatmul.mubr.f32.gmra.mrb[0].mxu0 %v956
        %v1097 = vpop.f32.mrb[0].mxu0
        %v1098 = vadd.f32 %v985, %v1097
        %v1099 = vpop.f32.mrb[0].mxu0
        %1100 = vmatprep.mubr.f32.mxu0 0.0
        %1101 = vmatmul.mubr.f32.gmra.mrb[0].mxu0 %v957
        %v1102 = vpop.f32.mrb[0].mxu0
        %v1103 = vadd.f32 %v985, %v1102
        %v1104 = vpop.f32.mrb[0].mxu0
        %1105 = vmatprep.mubr.f32.mxu0 0.0
        %1106 = vmatmul.mubr.f32.gmra.mrb[0].mxu0 %v958
        %v1107 = vpop.f32.mrb[0].mxu0
        %v1108 = vadd.f32 %v985, %v1107
        %v1109 = vpop.f32.mrb[0].mxu0
        %1110 = vmatprep.mubr.f32.mxu0 0.0
        %1111 = vmatmul.mubr.f32.gmra.mrb[0].mxu0 %v959
        %v1112 = vpop.f32.mrb[0].mxu0
        %v1113 = vadd.f32 %v985, %v1112
        %v1114 = vpop.f32.mrb[0].mxu0
        %1115 = vmatprep.mubr.f32.mxu0 0.0
        %1116 = vmatmul.mubr.f32.gmra.mrb[0].mxu0 %v960
        %v1117 = vpop.f32.mrb[0].mxu0
        %v1118 = vadd.f32 %v985, %v1117
        %v1119 = vpop.f32.mrb[0].mxu0
        %1120 = vmatprep.mubr.f32.mxu0 0.0
        %1121 = vmatmul.mubr.f32.gmra.mrb[0].mxu0 %v961
        %v1122 = vpop.f32.mrb[0].mxu0
        %v1123 = vadd.f32 %v985, %v1122
        %v1124 = vpop.f32.mrb[0].mxu0
        %1125 = vmatprep.mubr.f32.mxu0 0.0
        %1126 = vmatmul.mubr.f32.gmra.mrb[0].mxu0 %v962
        %v1127 = vpop.f32.mrb[0].mxu0
        %v1128 = vadd.f32 %v985, %v1127
        %v1129 = vpop.f32.mrb[0].mxu0
        %1130 = vmatprep.mubr.f32.mxu0 0.0
        %1131 = vmatmul.mubr.f32.gmra.mrb[0].mxu0 %v963
        %v1132 = vpop.f32.mrb[0].mxu0
        %v1133 = vadd.f32 %v985, %v1132
        %v1134 = vpop.f32.mrb[0].mxu0
        %1135 = vmatprep.mubr.f32.mxu0 0.0
        %1136 = vmatmul.mubr.f32.gmra.mrb[0].mxu0 %v964
        %v1137 = vpop.f32.mrb[0].mxu0
        %v1138 = vadd.f32 %v985, %v1137
        %v1139 = vpop.f32.mrb[0].mxu0
        %1140 = vmatprep.mubr.f32.mxu0 0.0
        %1141 = vmatmul.mubr.f32.gmra.mrb[0].mxu0 %v965
        %v1142 = vpop.f32.mrb[0].mxu0
        %v1143 = vadd.f32 %v985, %v1142
        %v1144 = vpop.f32.mrb[0].mxu0
        %1145 = vdwg.mxu0
        %1146 = vst [vmem:[%s260] sm:$0xff] %v1053
        %1147 = vst [vmem:[%s260 + $0x8] sm:$0xff] %v1058
        %1148 = vst [vmem:[%s260 + $0x10] sm:$0xff] %v1063
        %1149 = vst [vmem:[%s260 + $0x18] sm:$0xff] %v1068
        %1150 = vst [vmem:[%s260 + $0x20] sm:$0xff] %v1073
        %1151 = vst [vmem:[%s260 + $0x28] sm:$0xff] %v1078
        %1152 = vst [vmem:[%s260 + $0x30] sm:$0xff] %v1083
        %1153 = vst [vmem:[%s260 + $0x38] sm:$0xff] %v1088
        %1154 = vst [vmem:[%s260 + $0x40] sm:$0xff] %v1093
        %1155 = vst [vmem:[%s260 + $0x48] sm:$0xff] %v1098
        %1156 = vst [vmem:[%s260 + $0x50] sm:$0xff] %v1103
        %1157 = vst [vmem:[%s260 + $0x58] sm:$0xff] %v1108
        %1158 = vst [vmem:[%s260 + $0x60] sm:$0xff] %v1113
        %1159 = vst [vmem:[%s260 + $0x68] sm:$0xff] %v1118
        %1160 = vst [vmem:[%s260 + $0x70] sm:$0xff] %v1123
        %1161 = vst [vmem:[%s260 + $0x78] sm:$0xff] %v1128
        %1162 = vst [vmem:[%s260 + $0x80] sm:$0xff] %v1133
        %1163 = vst [vmem:[%s260 + $0x88] sm:$0xff] %v1138
        %1164 = vst [vmem:[%s260 + $0x90] sm:$0xff] %v1143
        %s1165 = sand.u32 %s160, 1
        %s1166 = scalar_lea.sflag [#allocation4], %s1165
        %s1167 = sand.u32 %s160, 1
        %s1168 = smul.addr %s1167, 152
        %s1169 = scalar_lea.vmem [#allocation5], %s1168
        // Predicated region
        $region49: #{tpu_custom_call.1} parent=43 // pred_check
          %p1170 = pneg %p170
        $region50: #{tpu_custom_call.1} parent=43 // pred_check_branch
          %1172 = sbr.rel (%p1170) target = $region52
        $region51: #{tpu_custom_call.1} parent=43 // pred_region
          %s1173 = smul.u32 19, %s21
          %s1175 = ssub.s32 2432, 2432
          %1176 = vsyncadd %s1166, %s1175
          %s1177 = smul.addr %s1173, 128
          %s1178 = scalar_lea.hbm %s6, %s1177
          %s1179 = sshll.u32 %s1169, 4
          %s1180 = int_to_ptr.vmem [resolvable:$true] %s1179
          %1185 = dma.vmem_to_hbm [thread:$0]  %s1180, 2432, %s1178, %s1166, 128, 128, 8
        $region52: #{tpu_custom_call.1} parent=43 // pred_fallthru
          _
      $region44: #{tpu_custom_call.1} parent=5 // pred_fallthru
        _
      %p1186 = scmp.le.s32.totalorder 2, %s16
      // Predicated region
      $region53: #{tpu_custom_call.1} parent=5 // pred_check
        %p1187 = pneg %p1186
      $region54: #{tpu_custom_call.1} parent=5 // pred_check_branch
        %1189 = sbr.rel (%p1187) target = $region56
      $region55: #{tpu_custom_call.1} parent=5 // pred_region
        %s1190 = ssub.s32 %s16, 2
        // Predicated region
        $region57: #{tpu_custom_call.1} parent=55 // pred_check
          %p1191 = pneg %p176
        $region58: #{tpu_custom_call.1} parent=55 // pred_check_branch
          %1193 = sbr.rel (%p1191) target = $region60
        $region59: #{tpu_custom_call.1} parent=55 // pred_region
          %s1194 = sand.u32 %s161, 1
          %s1195 = scalar_lea.sflag [#allocation4], %s1194
          %s1196 = sand.u32 %s161, 1
          %s1197 = smul.addr %s1196, 152
          %s1198 = scalar_lea.vmem [#allocation5], %s1197
          %1199 = dma.done %s1195, 2432
        $region60: #{tpu_custom_call.1} parent=55 // pred_fallthru
          _
      $region56: #{tpu_custom_call.1} parent=5 // pred_fallthru
        _
    $region6: #{tpu_custom_call.1} parent=1 // loop_footer
      %s20 = sadd.s32 1, %s16
    $region7: #{tpu_custom_call.1} parent=1 // loop_footer_branch
      %15 = sbr.rel target = $region3
    $region8: #{tpu_custom_call.1} parent=1 // loop_exit
      _
    %1200 = vsyncpa [#allocation3], 1
    %s1201 = scalar_lea.sflag [#allocation3], 1
    %1202 = vsyncpa %s1201, 1
    %1203 = vsyncpa [#allocation4], 1
    %s1204 = scalar_lea.sflag [#allocation4], 1
    %1205 = vsyncpa %s1204, 1

</llo_original>
